<compile_context>
chip_gen: v5e
topology: v5e:2x2
jax: 0.10.0
libtpu: 0.0.40
codegen_flags: <defaults>
</compile_context>

<pallas_src>
import functools

import jax
import jax.numpy as jnp
from jax.experimental import pallas as pl
from jax.experimental.pallas import tpu as pltpu

LANE = 128
SUBLANE = 8


def _round_up(x, m):
    return (x + m - 1) // m * m


def mu_fc_kernel(x_ref, w1_ref, b1_ref, w2_ref, b2_ref, w3_ref, b3_ref, o_ref):
    # Fused forward pass for one (TM, state) batch tile:
    #   y1 = relu(x @ W1 + b1)
    #   y2 = relu(y1 @ W2 + b2)
    #   y  = tanh(y2 @ W3 + b3)
    # Dots: bf16 x bf16 -> f32 accumulate (MXU). Elementwise path stays f32.
    x = x_ref[...]

    h1 = jnp.dot(x.astype(jnp.bfloat16), w1_ref[...],
                 preferred_element_type=jnp.float32) + b1_ref[...]
    y1 = jnp.maximum(h1, 0.0)

    h2 = jnp.dot(y1.astype(jnp.bfloat16), w2_ref[...],
                 preferred_element_type=jnp.float32) + b2_ref[...]
    y2 = jnp.maximum(h2, 0.0)

    h3 = jnp.dot(y2.astype(jnp.bfloat16), w3_ref[...],
                 preferred_element_type=jnp.float32) + b3_ref[...]
    o_ref[...] = jnp.tanh(h3).astype(o_ref.dtype)


@jax.jit
def mu_fc_forward(x, w1, b1, w2, b2, w3, b3):
    batch, state_size = x.shape
    hidden = w1.shape[1]
    action_size = w3.shape[1]

    # ---- lane-dense output: pad last layer's output features to 128 ----
    act_pad = _round_up(max(action_size, LANE), LANE)
    w3_p = jnp.pad(w3, ((0, 0), (0, act_pad - action_size)))
    b3_p = jnp.pad(b3, ((0, 0), (0, act_pad - action_size)))

    # ---- batch tiling: MXU-aligned TM for big batches, sublane-aligned
    #      minimum for tiny ones; pad batch to a multiple of TM ----
    if batch >= 256:
        tm = 256
    else:
        tm = _round_up(batch, SUBLANE)
    padded_batch = _round_up(batch, tm)
    if padded_batch != batch:
        x = jnp.pad(x, ((0, padded_batch - batch), (0, 0)))

    # bf16 weights for the MXU (no-op if already stored bf16), f32 biases.
    w1b = w1.astype(jnp.bfloat16)
    w2b = w2.astype(jnp.bfloat16)
    w3b = w3_p.astype(jnp.bfloat16)

    grid = (padded_batch // tm,)

    out = pl.pallas_call(
        mu_fc_kernel,
        out_shape=jax.ShapeDtypeStruct((padded_batch, act_pad), jnp.float32),
        grid=grid,
        in_specs=[
            # batch tile of activations
            pl.BlockSpec((tm, state_size), lambda i: (i, 0)),
            # weights / biases: same block for every grid step -> VMEM-resident
            pl.BlockSpec((state_size, hidden), lambda i: (0, 0)),
            pl.BlockSpec((1, hidden), lambda i: (0, 0)),
            pl.BlockSpec((hidden, hidden), lambda i: (0, 0)),
            pl.BlockSpec((1, hidden), lambda i: (0, 0)),
            pl.BlockSpec((hidden, act_pad), lambda i: (0, 0)),
            pl.BlockSpec((1, act_pad), lambda i: (0, 0)),
        ],
        out_specs=pl.BlockSpec((tm, act_pad), lambda i: (i, 0)),
        compiler_params=pltpu.CompilerParams(
            dimension_semantics=("parallel",),
        ),
    )(x, w1b, b1, w2b, b2, w3b, b3_p)

    # Strip batch padding and the lane padding of the output features.
    return out[:batch, :action_size]


def init_linear_params(key, in_features, out_features):
    # Mimic torch.nn.Linear default init: U(-1/sqrt(in), 1/sqrt(in)).
    kw, kb = jax.random.split(key)
    bound = 1.0 / jnp.sqrt(jnp.float32(in_features))
    # Stored as (in, out) == transpose of PyTorch's (out, in) weight.
    # Weights kept bf16 (MXU-native, half the DMA bytes); biases f32.
    w = jax.random.uniform(kw, (in_features, out_features), jnp.float32,
                           minval=-bound, maxval=bound).astype(jnp.bfloat16)
    # Bias kept 2D (1, out) so it lives nicely in VMEM and broadcasts over batch.
    b = jax.random.uniform(kb, (1, out_features), jnp.float32,
                           minval=-bound, maxval=bound)
    return w, b


def _ref_forward(x, w1, b1, w2, b2, w3, b3):
    # Pure-JAX reference with the same numerics (bf16 operands, f32 accumulate).
    def dot(a, w):
        return jnp.dot(a.astype(jnp.bfloat16), w.astype(jnp.bfloat16),
                       preferred_element_type=jnp.float32)

    y1 = jnp.maximum(dot(x, w1) + b1, 0.0)
    y2 = jnp.maximum(dot(y1, w2) + b2, 0.0)
    return jnp.tanh(dot(y2, w3) + b3)


if __name__ == "__main__":
    key = jax.random.PRNGKey(0)
    k_x, k1, k2, k3 = jax.random.split(key, 4)

    batch = 2
    state_size = 16
    hidden = 256
    action_size = 4

    x = jax.random.normal(k_x, (batch, state_size), jnp.float32)

    w1, b1 = init_linear_params(k1, state_size, hidden)
    w2, b2 = init_linear_params(k2, hidden, hidden)
    w3, b3 = init_linear_params(k3, hidden, action_size)

    y = mu_fc_forward(x, w1, b1, w2, b2, w3, b3)
    jax.block_until_ready(y)

    y_ref = _ref_forward(x, w1, b1, w2, b2, w3, b3)
    assert y.shape == (batch, action_size)
    assert jnp.allclose(y, y_ref, atol=1e-2, rtol=1e-2), "mismatch vs reference"
    assert bool(jnp.all(jnp.isfinite(y))), "non-finite output"

    print("KERNEL_OK")
</pallas_src>

<mosaic_0001>
module attributes {stable_mosaic.version = 11 : i64} {
  func.func @mu_fc_kernel(%arg0: i32, %arg1: memref<8x16xf32, #tpu.memory_space<vmem>>, %arg2: memref<16x256xbf16, #tpu.memory_space<vmem>>, %arg3: memref<1x256xf32, #tpu.memory_space<vmem>>, %arg4: memref<256x256xbf16, #tpu.memory_space<vmem>>, %arg5: memref<1x256xf32, #tpu.memory_space<vmem>>, %arg6: memref<256x128xbf16, #tpu.memory_space<vmem>>, %arg7: memref<1x128xf32, #tpu.memory_space<vmem>>, %arg8: memref<8x128xf32, #tpu.memory_space<vmem>>) attributes {dimension_semantics = [#tpu.dimension_semantics<parallel>], iteration_bounds = array<i64: 1>, scalar_prefetch = 0 : i64, scratch_operands = 0 : i64, tpu.core_type = #tpu.core_type<tc>, window_params = [{transform_indices = @transform_0, window_bounds = array<i64: 8, 16>}, {pipeline_mode = #tpu.pipeline_mode<synchronous>, transform_indices = @transform_1, window_bounds = array<i64: 16, 256>}, {pipeline_mode = #tpu.pipeline_mode<synchronous>, transform_indices = @transform_2, window_bounds = array<i64: 1, 256>}, {pipeline_mode = #tpu.pipeline_mode<synchronous>, transform_indices = @transform_3, window_bounds = array<i64: 256, 256>}, {pipeline_mode = #tpu.pipeline_mode<synchronous>, transform_indices = @transform_4, window_bounds = array<i64: 1, 256>}, {pipeline_mode = #tpu.pipeline_mode<synchronous>, transform_indices = @transform_5, window_bounds = array<i64: 256, 128>}, {pipeline_mode = #tpu.pipeline_mode<synchronous>, transform_indices = @transform_6, window_bounds = array<i64: 1, 128>}, {transform_indices = @transform_7, window_bounds = array<i64: 8, 128>}]} {
    %c0 = arith.constant 0 : index
    %c0_0 = arith.constant 0 : index
    %0 = vector.load %arg1[%c0, %c0_0] : memref<8x16xf32, #tpu.memory_space<vmem>>, vector<8x16xf32>
    %1 = arith.truncf %0 : vector<8x16xf32> to vector<8x16xbf16>
    %c0_1 = arith.constant 0 : index
    %c0_2 = arith.constant 0 : index
    %2 = vector.load %arg2[%c0_1, %c0_2] : memref<16x256xbf16, #tpu.memory_space<vmem>>, vector<16x256xbf16>
    %cst = arith.constant dense<0.000000e+00> : vector<8x256xf32>
    %3 = tpu.matmul %1, %2, %cst {dimension_numbers = #tpu.dot_dimension_numbers<[1], [0], [0], [1], [0, 0, 1, 1], [], []>} : vector<8x16xbf16>, vector<16x256xbf16>, vector<8x256xf32> -> vector<8x256xf32>
    %c0_3 = arith.constant 0 : index
    %c0_4 = arith.constant 0 : index
    %4 = vector.load %arg3[%c0_3, %c0_4] : memref<1x256xf32, #tpu.memory_space<vmem>>, vector<1x256xf32>
    %5 = vector.broadcast %4 : vector<1x256xf32> to vector<8x256xf32>
    %6 = arith.addf %3, %5 : vector<8x256xf32>
    %cst_5 = arith.constant 0.000000e+00 : f32
    %7 = vector.broadcast %cst_5 : f32 to vector<8x256xf32>
    %8 = arith.maximumf %6, %7 : vector<8x256xf32>
    %9 = arith.truncf %8 : vector<8x256xf32> to vector<8x256xbf16>
    %c0_6 = arith.constant 0 : index
    %c0_7 = arith.constant 0 : index
    %10 = vector.load %arg4[%c0_6, %c0_7] : memref<256x256xbf16, #tpu.memory_space<vmem>>, vector<256x256xbf16>
    %cst_8 = arith.constant dense<0.000000e+00> : vector<8x256xf32>
    %11 = tpu.matmul %9, %10, %cst_8 {dimension_numbers = #tpu.dot_dimension_numbers<[1], [0], [0], [1], [0, 0, 1, 1], [], []>} : vector<8x256xbf16>, vector<256x256xbf16>, vector<8x256xf32> -> vector<8x256xf32>
    %c0_9 = arith.constant 0 : index
    %c0_10 = arith.constant 0 : index
    %12 = vector.load %arg5[%c0_9, %c0_10] : memref<1x256xf32, #tpu.memory_space<vmem>>, vector<1x256xf32>
    %13 = vector.broadcast %12 : vector<1x256xf32> to vector<8x256xf32>
    %14 = arith.addf %11, %13 : vector<8x256xf32>
    %cst_11 = arith.constant 0.000000e+00 : f32
    %15 = vector.broadcast %cst_11 : f32 to vector<8x256xf32>
    %16 = arith.maximumf %14, %15 : vector<8x256xf32>
    %17 = arith.truncf %16 : vector<8x256xf32> to vector<8x256xbf16>
    %c0_12 = arith.constant 0 : index
    %c0_13 = arith.constant 0 : index
    %18 = vector.load %arg6[%c0_12, %c0_13] : memref<256x128xbf16, #tpu.memory_space<vmem>>, vector<256x128xbf16>
    %cst_14 = arith.constant dense<0.000000e+00> : vector<8x128xf32>
    %19 = tpu.matmul %17, %18, %cst_14 {dimension_numbers = #tpu.dot_dimension_numbers<[1], [0], [0], [1], [0, 0, 1, 1], [], []>} : vector<8x256xbf16>, vector<256x128xbf16>, vector<8x128xf32> -> vector<8x128xf32>
    %c0_15 = arith.constant 0 : index
    %c0_16 = arith.constant 0 : index
    %20 = vector.load %arg7[%c0_15, %c0_16] : memref<1x128xf32, #tpu.memory_space<vmem>>, vector<1x128xf32>
    %21 = vector.broadcast %20 : vector<1x128xf32> to vector<8x128xf32>
    %22 = arith.addf %19, %21 : vector<8x128xf32>
    %23 = math.tanh %22 : vector<8x128xf32>
    %c0_17 = arith.constant 0 : index
    %c0_18 = arith.constant 0 : index
    %24 = vector.load %arg8[%c0_17, %c0_18] : memref<8x128xf32, #tpu.memory_space<vmem>>, vector<8x128xf32>
    tpu.vector_store %arg8[%c0_17, %c0_18], %23 {strides = array<i32>} : memref<8x128xf32, #tpu.memory_space<vmem>>, vector<8x128xf32>,
    return
  }
  func.func @transform_0(%arg0: i32) -> (i32, i32) {
    %c0_i32 = arith.constant 0 : i32
    %c0_i32_0 = arith.constant 0 : i32
    return %arg0, %c0_i32 : i32, i32
  }
  func.func @transform_1(%arg0: i32) -> (i32, i32) {
    %c0_i32 = arith.constant 0 : i32
    %c0_i32_0 = arith.constant 0 : i32
    %c0_i32_1 = arith.constant 0 : i32
    return %c0_i32, %c0_i32_0 : i32, i32
  }
  func.func @transform_2(%arg0: i32) -> (i32, i32) {
    %c0_i32 = arith.constant 0 : i32
    %c0_i32_0 = arith.constant 0 : i32
    %c0_i32_1 = arith.constant 0 : i32
    return %c0_i32, %c0_i32_0 : i32, i32
  }
  func.func @transform_3(%arg0: i32) -> (i32, i32) {
    %c0_i32 = arith.constant 0 : i32
    %c0_i32_0 = arith.constant 0 : i32
    %c0_i32_1 = arith.constant 0 : i32
    return %c0_i32, %c0_i32_0 : i32, i32
  }
  func.func @transform_4(%arg0: i32) -> (i32, i32) {
    %c0_i32 = arith.constant 0 : i32
    %c0_i32_0 = arith.constant 0 : i32
    %c0_i32_1 = arith.constant 0 : i32
    return %c0_i32, %c0_i32_0 : i32, i32
  }
  func.func @transform_5(%arg0: i32) -> (i32, i32) {
    %c0_i32 = arith.constant 0 : i32
    %c0_i32_0 = arith.constant 0 : i32
    %c0_i32_1 = arith.constant 0 : i32
    return %c0_i32, %c0_i32_0 : i32, i32
  }
  func.func @transform_6(%arg0: i32) -> (i32, i32) {
    %c0_i32 = arith.constant 0 : i32
    %c0_i32_0 = arith.constant 0 : i32
    %c0_i32_1 = arith.constant 0 : i32
    return %c0_i32, %c0_i32_0 : i32, i32
  }
  func.func @transform_7(%arg0: i32) -> (i32, i32) {
    %c0_i32 = arith.constant 0 : i32
    %c0_i32_0 = arith.constant 0 : i32
    return %arg0, %c0_i32 : i32, i32
  }
}

</mosaic_0001>

<llo_original>
// kernel: mu_fc_forward.1
$region0: #{mu_fc_forward.1}
  #allocation0 [shape = 'u32[]', space=smem, size = 0x4, offset = 0x4, fixed_abs, tag = 'smem constant byte address 0x4 - core index']
  #allocation1 [shape = 'u32[72,128]{1,0:T(1,128)}', space=vmem, size = 0x9000, scoped, tag = 'internal scratch']
  %s0 = inlined_call_operand.vmem [shape: f32[8,16], index: 0, kind: input, shape index: {}]
  %s1 = inlined_call_operand.vmem [shape: bf16[16,256], index: 1, kind: input, shape index: {}]
  %s2 = inlined_call_operand.vmem [shape: f32[1,256], index: 2, kind: input, shape index: {}]
  %s3 = inlined_call_operand.vmem [shape: bf16[256,256], index: 3, kind: input, shape index: {}]
  %s4 = inlined_call_operand.vmem [shape: f32[1,256], index: 4, kind: input, shape index: {}]
  %s5 = inlined_call_operand.vmem [shape: bf16[256,128], index: 5, kind: input, shape index: {}]
  %s6 = inlined_call_operand.vmem [shape: f32[1,128], index: 6, kind: input, shape index: {}]
  %s7 = inlined_call_operand.vmem [shape: f32[8,128], index: 7, kind: output, shape index: {}]
  %s8 = sld [smem:[#allocation0]]
  $region38: #{mu_fc_forward.1} parent=0
    _
  %s10 = ssub.s32 1, %s8
  %s11 = scalar_select 0, %s10, %s8
  // Predicated region
  $region2: #{mu_fc_forward.1} parent=0 // pred_check
    _
  $region3: #{mu_fc_forward.1} parent=0 // pred_check_branch
    %13 = sbr.rel (0) target = $region5
  $region4: #{mu_fc_forward.1} parent=0 // pred_region
    _
  $region5: #{mu_fc_forward.1} parent=0 // pred_fallthru
    _
  // Predicated region
  $region6: #{mu_fc_forward.1} parent=0 // pred_check
    _
  $region7: #{mu_fc_forward.1} parent=0 // pred_check_branch
    %15 = sbr.rel (0) target = $region9
  $region8: #{mu_fc_forward.1} parent=0 // pred_region
    _
  $region9: #{mu_fc_forward.1} parent=0 // pred_fallthru
    _
  // Predicated region
  $region10: #{mu_fc_forward.1} parent=0 // pred_check
    _
  $region11: #{mu_fc_forward.1} parent=0 // pred_check_branch
    %17 = sbr.rel (0) target = $region13
  $region12: #{mu_fc_forward.1} parent=0 // pred_region
    _
  $region13: #{mu_fc_forward.1} parent=0 // pred_fallthru
    _
  // Predicated region
  $region14: #{mu_fc_forward.1} parent=0 // pred_check
    _
  $region15: #{mu_fc_forward.1} parent=0 // pred_check_branch
    %19 = sbr.rel (0) target = $region17
  $region16: #{mu_fc_forward.1} parent=0 // pred_region
    _
  $region17: #{mu_fc_forward.1} parent=0 // pred_fallthru
    _
  // Predicated region
  $region18: #{mu_fc_forward.1} parent=0 // pred_check
    _
  $region19: #{mu_fc_forward.1} parent=0 // pred_check_branch
    %21 = sbr.rel (0) target = $region21
  $region20: #{mu_fc_forward.1} parent=0 // pred_region
    _
  $region21: #{mu_fc_forward.1} parent=0 // pred_fallthru
    _
  // Predicated region
  $region22: #{mu_fc_forward.1} parent=0 // pred_check
    _
  $region23: #{mu_fc_forward.1} parent=0 // pred_check_branch
    %23 = sbr.rel (0) target = $region25
  $region24: #{mu_fc_forward.1} parent=0 // pred_region
    _
  $region25: #{mu_fc_forward.1} parent=0 // pred_fallthru
    _
  // Predicated region
  $region26: #{mu_fc_forward.1} parent=0 // pred_check
    _
  $region27: #{mu_fc_forward.1} parent=0 // pred_check_branch
    %25 = sbr.rel (0) target = $region29
  $region28: #{mu_fc_forward.1} parent=0 // pred_region
    _
  $region29: #{mu_fc_forward.1} parent=0 // pred_fallthru
    _
  %v27 = vld [vmem:[%s0] sm:$0xff]
  %v28 = vpack.c.bf16 %v27, %v27
  %v29 = vld [vmem:[%s1] sm:$0xff]
  %v30 = vld [vmem:[%s1 + $0x8] sm:$0xff]
  %v31 = vld [vmem:[%s2] sm:$0x3]
  %v33 = vperm.slane %v31, 0
  %v34 = vperm.slane %v31, 1
  %v39 = vunpack.c.l.b16 %v29
  %v40 = vunpack.c.h.b16 %v29
  %v41 = vunpack.c.l.b16 %v30
  %v42 = vunpack.c.h.b16 %v30
  %v43 = vpack.c.b16 %v41, %v39
  %v44 = vpack.c.b16 %v42, %v40
  %vm47 = vcmask 130048
  %v49 = vsel %vm47, %v28, 0
  %51 = vmatpush.bf16.msra.mxu0 0
  %52 = vmatpush.bf16.msra.mxu0 0
  %53 = vmatpush.bf16.msra.mxu0 0
  %54 = vmatpush.bf16.msra.mxu0 0
  %55 = vmatpush.bf16.msra.mxu0 0
  %56 = vmatpush.bf16.msra.mxu0 0
  %57 = vmatpush.bf16.msra.mxu0 0
  %58 = vmatpush.bf16.msra.mxu0 %v43
  %59 = vmatmul.bf16.gmra.mxu0 %v49
  %v60 = vpop.f32.mrf.mxu0
  %v61 = vadd.f32 %v33, %v60
  %v62 = vpop.f32.mrf.mxu0
  %63 = vdwg.mxu0
  %64 = vmatpush.bf16.msra.mxu0 0
  %65 = vmatpush.bf16.msra.mxu0 0
  %66 = vmatpush.bf16.msra.mxu0 0
  %67 = vmatpush.bf16.msra.mxu0 0
  %68 = vmatpush.bf16.msra.mxu0 0
  %69 = vmatpush.bf16.msra.mxu0 0
  %70 = vmatpush.bf16.msra.mxu0 0
  %71 = vmatpush.bf16.msra.mxu0 %v44
  %72 = vmatmul.bf16.gmra.mxu0 %v49
  %v73 = vpop.f32.mrf.mxu0
  %v74 = vadd.f32 %v34, %v73
  %v75 = vpop.f32.mrf.mxu0
  %76 = vdwg.mxu0
  %v77 = vmax.f32 %v61, 0.0
  %v78 = vmax.f32 %v74, 0.0
  %v79 = vpack.c.bf16 %v77, %v77
  %v80 = vpack.c.bf16 %v78, %v78
  %v81 = vld [vmem:[%s3] sm:$0xff]
  %v82 = vld [vmem:[%s3 + $0x8] sm:$0xff]
  %v83 = vld [vmem:[%s3 + $0x10] sm:$0xff]
  %v84 = vld [vmem:[%s3 + $0x18] sm:$0xff]
  %v85 = vld [vmem:[%s3 + $0x20] sm:$0xff]
  %v86 = vld [vmem:[%s3 + $0x28] sm:$0xff]
  %v87 = vld [vmem:[%s3 + $0x30] sm:$0xff]
  %v88 = vld [vmem:[%s3 + $0x38] sm:$0xff]
  %v89 = vld [vmem:[%s3 + $0x40] sm:$0xff]
  %v90 = vld [vmem:[%s3 + $0x48] sm:$0xff]
  %v91 = vld [vmem:[%s3 + $0x50] sm:$0xff]
  %v92 = vld [vmem:[%s3 + $0x58] sm:$0xff]
  %v93 = vld [vmem:[%s3 + $0x60] sm:$0xff]
  %v94 = vld [vmem:[%s3 + $0x68] sm:$0xff]
  %v95 = vld [vmem:[%s3 + $0x70] sm:$0xff]
  %v96 = vld [vmem:[%s3 + $0x78] sm:$0xff]
  %v97 = vld [vmem:[%s3 + $0x80] sm:$0xff]
  %v98 = vld [vmem:[%s3 + $0x88] sm:$0xff]
  %v99 = vld [vmem:[%s3 + $0x90] sm:$0xff]
  %v100 = vld [vmem:[%s3 + $0x98] sm:$0xff]
  %v101 = vld [vmem:[%s3 + $0xa0] sm:$0xff]
  %v102 = vld [vmem:[%s3 + $0xa8] sm:$0xff]
  %v103 = vld [vmem:[%s3 + $0xb0] sm:$0xff]
  %v104 = vld [vmem:[%s3 + $0xb8] sm:$0xff]
  %v105 = vld [vmem:[%s3 + $0xc0] sm:$0xff]
  %v106 = vld [vmem:[%s3 + $0xc8] sm:$0xff]
  %v107 = vld [vmem:[%s3 + $0xd0] sm:$0xff]
  %v108 = vld [vmem:[%s3 + $0xd8] sm:$0xff]
  %v109 = vld [vmem:[%s3 + $0xe0] sm:$0xff]
  %v110 = vld [vmem:[%s3 + $0xe8] sm:$0xff]
  %v111 = vld [vmem:[%s3 + $0xf0] sm:$0xff]
  %v112 = vld [vmem:[%s3 + $0xf8] sm:$0xff]
  %v113 = vld [vmem:[%s4] sm:$0x3]
  %v115 = vperm.slane %v113, 0
  %v116 = vperm.slane %v113, 1
  %v151 = vunpack.c.l.b16 %v81
  %v152 = vunpack.c.h.b16 %v81
  %v153 = vunpack.c.l.b16 %v82
  %v154 = vunpack.c.h.b16 %v82
  %v155 = vunpack.c.l.b16 %v83
  %v156 = vunpack.c.h.b16 %v83
  %v157 = vunpack.c.l.b16 %v84
  %v158 = vunpack.c.h.b16 %v84
  %v159 = vunpack.c.l.b16 %v85
  %v160 = vunpack.c.h.b16 %v85
  %v161 = vunpack.c.l.b16 %v86
  %v162 = vunpack.c.h.b16 %v86
  %v163 = vunpack.c.l.b16 %v87
  %v164 = vunpack.c.h.b16 %v87
  %v165 = vunpack.c.l.b16 %v88
  %v166 = vunpack.c.h.b16 %v88
  %v167 = vunpack.c.l.b16 %v89
  %v168 = vunpack.c.h.b16 %v89
  %v169 = vunpack.c.l.b16 %v90
  %v170 = vunpack.c.h.b16 %v90
  %v171 = vunpack.c.l.b16 %v91
  %v172 = vunpack.c.h.b16 %v91
  %v173 = vunpack.c.l.b16 %v92
  %v174 = vunpack.c.h.b16 %v92
  %v175 = vunpack.c.l.b16 %v93
  %v176 = vunpack.c.h.b16 %v93
  %v177 = vunpack.c.l.b16 %v94
  %v178 = vunpack.c.h.b16 %v94
  %v179 = vunpack.c.l.b16 %v95
  %v180 = vunpack.c.h.b16 %v95
  %v181 = vunpack.c.l.b16 %v96
  %v182 = vunpack.c.h.b16 %v96
  %v183 = vunpack.c.l.b16 %v97
  %v184 = vunpack.c.h.b16 %v97
  %v185 = vunpack.c.l.b16 %v98
  %v186 = vunpack.c.h.b16 %v98
  %v187 = vunpack.c.l.b16 %v99
  %v188 = vunpack.c.h.b16 %v99
  %v189 = vunpack.c.l.b16 %v100
  %v190 = vunpack.c.h.b16 %v100
  %v191 = vunpack.c.l.b16 %v101
  %v192 = vunpack.c.h.b16 %v101
  %v193 = vunpack.c.l.b16 %v102
  %v194 = vunpack.c.h.b16 %v102
  %v195 = vunpack.c.l.b16 %v103
  %v196 = vunpack.c.h.b16 %v103
  %v197 = vunpack.c.l.b16 %v104
  %v198 = vunpack.c.h.b16 %v104
  %v199 = vunpack.c.l.b16 %v105
  %v200 = vunpack.c.h.b16 %v105
  %v201 = vunpack.c.l.b16 %v106
  %v202 = vunpack.c.h.b16 %v106
  %v203 = vunpack.c.l.b16 %v107
  %v204 = vunpack.c.h.b16 %v107
  %v205 = vunpack.c.l.b16 %v108
  %v206 = vunpack.c.h.b16 %v108
  %v207 = vunpack.c.l.b16 %v109
  %v208 = vunpack.c.h.b16 %v109
  %v209 = vunpack.c.l.b16 %v110
  %v210 = vunpack.c.h.b16 %v110
  %v211 = vunpack.c.l.b16 %v111
  %v212 = vunpack.c.h.b16 %v111
  %v213 = vunpack.c.l.b16 %v112
  %v214 = vunpack.c.h.b16 %v112
  %v215 = vpack.c.b16 %v153, %v151
  %v216 = vpack.c.b16 %v154, %v152
  %v217 = vpack.c.b16 %v157, %v155
  %v218 = vpack.c.b16 %v158, %v156
  %v219 = vpack.c.b16 %v161, %v159
  %v220 = vpack.c.b16 %v162, %v160
  %v221 = vpack.c.b16 %v165, %v163
  %v222 = vpack.c.b16 %v166, %v164
  %v223 = vpack.c.b16 %v169, %v167
  %v224 = vpack.c.b16 %v170, %v168
  %v225 = vpack.c.b16 %v173, %v171
  %v226 = vpack.c.b16 %v174, %v172
  %v227 = vpack.c.b16 %v177, %v175
  %v228 = vpack.c.b16 %v178, %v176
  %v229 = vpack.c.b16 %v181, %v179
  %v230 = vpack.c.b16 %v182, %v180
  %v231 = vpack.c.b16 %v185, %v183
  %v232 = vpack.c.b16 %v186, %v184
  %v233 = vpack.c.b16 %v189, %v187
  %v234 = vpack.c.b16 %v190, %v188
  %v235 = vpack.c.b16 %v193, %v191
  %v236 = vpack.c.b16 %v194, %v192
  %v237 = vpack.c.b16 %v197, %v195
  %v238 = vpack.c.b16 %v198, %v196
  %v239 = vpack.c.b16 %v201, %v199
  %v240 = vpack.c.b16 %v202, %v200
  %v241 = vpack.c.b16 %v205, %v203
  %v242 = vpack.c.b16 %v206, %v204
  %v243 = vpack.c.b16 %v209, %v207
  %v244 = vpack.c.b16 %v210, %v208
  %v245 = vpack.c.b16 %v213, %v211
  %v246 = vpack.c.b16 %v214, %v212
  %279 = vmatpush.bf16.msra.mxu0 %v229
  %280 = vmatpush.bf16.msra.mxu0 %v227
  %281 = vmatpush.bf16.msra.mxu0 %v225
  %282 = vmatpush.bf16.msra.mxu0 %v223
  %283 = vmatpush.bf16.msra.mxu0 %v221
  %284 = vmatpush.bf16.msra.mxu0 %v219
  %285 = vmatpush.bf16.msra.mxu0 %v217
  %286 = vmatpush.bf16.msra.mxu0 %v215
  %287 = vmatmul.bf16.gmra.mxu0 %v79
  %v288 = vpop.f32.mrf.mxu0
  %v289 = vadd.f32 %v115, %v288
  %v290 = vpop.f32.mrf.mxu0
  %291 = vdwg.mxu0
  %292 = vmatpush.bf16.msra.mxu0 %v245
  %293 = vmatpush.bf16.msra.mxu0 %v243
  %294 = vmatpush.bf16.msra.mxu0 %v241
  %295 = vmatpush.bf16.msra.mxu0 %v239
  %296 = vmatpush.bf16.msra.mxu0 %v237
  %297 = vmatpush.bf16.msra.mxu0 %v235
  %298 = vmatpush.bf16.msra.mxu0 %v233
  %299 = vmatpush.bf16.msra.mxu0 %v231
  %300 = vmatmul.bf16.gmra.mxu0 %v80
  %v301 = vpop.f32.mrf.mxu0
  %v302 = vadd.f32 %v289, %v301
  %v303 = vpop.f32.mrf.mxu0
  %304 = vdwg.mxu0
  %305 = vmatpush.bf16.msra.mxu0 %v230
  %306 = vmatpush.bf16.msra.mxu0 %v228
  %307 = vmatpush.bf16.msra.mxu0 %v226
  %308 = vmatpush.bf16.msra.mxu0 %v224
  %309 = vmatpush.bf16.msra.mxu0 %v222
  %310 = vmatpush.bf16.msra.mxu0 %v220
  %311 = vmatpush.bf16.msra.mxu0 %v218
  %312 = vmatpush.bf16.msra.mxu0 %v216
  %313 = vmatmul.bf16.gmra.mxu0 %v79
  %v314 = vpop.f32.mrf.mxu0
  %v315 = vadd.f32 %v116, %v314
  %v316 = vpop.f32.mrf.mxu0
  %317 = vdwg.mxu0
  %318 = vmatpush.bf16.msra.mxu0 %v246
  %319 = vmatpush.bf16.msra.mxu0 %v244
  %320 = vmatpush.bf16.msra.mxu0 %v242
  %321 = vmatpush.bf16.msra.mxu0 %v240
  %322 = vmatpush.bf16.msra.mxu0 %v238
  %323 = vmatpush.bf16.msra.mxu0 %v236
  %324 = vmatpush.bf16.msra.mxu0 %v234
  %325 = vmatpush.bf16.msra.mxu0 %v232
  %326 = vmatmul.bf16.gmra.mxu0 %v80
  %v327 = vpop.f32.mrf.mxu0
  %v328 = vadd.f32 %v315, %v327
  %v329 = vpop.f32.mrf.mxu0
  %330 = vdwg.mxu0
  %v331 = vmax.f32 %v302, 0.0
  %v332 = vmax.f32 %v328, 0.0
  %v333 = vpack.c.bf16 %v331, %v331
  %v334 = vpack.c.bf16 %v332, %v332
  %v335 = vld [vmem:[%s5] sm:$0xf]
  %v336 = vld [vmem:[%s5 + $0x4] sm:$0xf]
  %v337 = vld [vmem:[%s5 + $0x8] sm:$0xf]
  %v338 = vld [vmem:[%s5 + $0xc] sm:$0xf]
  %v339 = vld [vmem:[%s5 + $0x10] sm:$0xf]
  %v340 = vld [vmem:[%s5 + $0x14] sm:$0xf]
  %v341 = vld [vmem:[%s5 + $0x18] sm:$0xf]
  %v342 = vld [vmem:[%s5 + $0x1c] sm:$0xf]
  %v343 = vld [vmem:[%s5 + $0x20] sm:$0xf]
  %v344 = vld [vmem:[%s5 + $0x24] sm:$0xf]
  %v345 = vld [vmem:[%s5 + $0x28] sm:$0xf]
  %v346 = vld [vmem:[%s5 + $0x2c] sm:$0xf]
  %v347 = vld [vmem:[%s5 + $0x30] sm:$0xf]
  %v348 = vld [vmem:[%s5 + $0x34] sm:$0xf]
  %v349 = vld [vmem:[%s5 + $0x38] sm:$0xf]
  %v350 = vld [vmem:[%s5 + $0x3c] sm:$0xf]
  %v351 = vld [vmem:[%s5 + $0x40] sm:$0xf]
  %v352 = vld [vmem:[%s5 + $0x44] sm:$0xf]
  %v353 = vld [vmem:[%s5 + $0x48] sm:$0xf]
  %v354 = vld [vmem:[%s5 + $0x4c] sm:$0xf]
  %v355 = vld [vmem:[%s5 + $0x50] sm:$0xf]
  %v356 = vld [vmem:[%s5 + $0x54] sm:$0xf]
  %v357 = vld [vmem:[%s5 + $0x58] sm:$0xf]
  %v358 = vld [vmem:[%s5 + $0x5c] sm:$0xf]
  %v359 = vld [vmem:[%s5 + $0x60] sm:$0xf]
  %v360 = vld [vmem:[%s5 + $0x64] sm:$0xf]
  %v361 = vld [vmem:[%s5 + $0x68] sm:$0xf]
  %v362 = vld [vmem:[%s5 + $0x6c] sm:$0xf]
  %v363 = vld [vmem:[%s5 + $0x70] sm:$0xf]
  %v364 = vld [vmem:[%s5 + $0x74] sm:$0xf]
  %v365 = vld [vmem:[%s5 + $0x78] sm:$0xf]
  %v366 = vld [vmem:[%s5 + $0x7c] sm:$0xf]
  %v367 = vld [vmem:[%s6] sm:$0x1]
  %v369 = vperm.slane %v367, 0
  %v403 = vunpack.c.l.b16 %v335
  %v404 = vunpack.c.l.b16 %v336
  %v405 = vunpack.c.l.b16 %v337
  %v406 = vunpack.c.l.b16 %v338
  %v407 = vunpack.c.l.b16 %v339
  %v408 = vunpack.c.l.b16 %v340
  %v409 = vunpack.c.l.b16 %v341
  %v410 = vunpack.c.l.b16 %v342
  %v411 = vunpack.c.l.b16 %v343
  %v412 = vunpack.c.l.b16 %v344
  %v413 = vunpack.c.l.b16 %v345
  %v414 = vunpack.c.l.b16 %v346
  %v415 = vunpack.c.l.b16 %v347
  %v416 = vunpack.c.l.b16 %v348
  %v417 = vunpack.c.l.b16 %v349
  %v418 = vunpack.c.l.b16 %v350
  %v419 = vunpack.c.l.b16 %v351
  %v420 = vunpack.c.l.b16 %v352
  %v421 = vunpack.c.l.b16 %v353
  %v422 = vunpack.c.l.b16 %v354
  %v423 = vunpack.c.l.b16 %v355
  %v424 = vunpack.c.l.b16 %v356
  %v425 = vunpack.c.l.b16 %v357
  %v426 = vunpack.c.l.b16 %v358
  %v427 = vunpack.c.l.b16 %v359
  %v428 = vunpack.c.l.b16 %v360
  %v429 = vunpack.c.l.b16 %v361
  %v430 = vunpack.c.l.b16 %v362
  %v431 = vunpack.c.l.b16 %v363
  %v432 = vunpack.c.l.b16 %v364
  %v433 = vunpack.c.l.b16 %v365
  %v434 = vunpack.c.l.b16 %v366
  %v435 = vpack.c.b16 %v404, %v403
  %v436 = vpack.c.b16 %v406, %v405
  %v437 = vpack.c.b16 %v408, %v407
  %v438 = vpack.c.b16 %v410, %v409
  %v439 = vpack.c.b16 %v412, %v411
  %v440 = vpack.c.b16 %v414, %v413
  %v441 = vpack.c.b16 %v416, %v415
  %v442 = vpack.c.b16 %v418, %v417
  %v443 = vpack.c.b16 %v420, %v419
  %v444 = vpack.c.b16 %v422, %v421
  %v445 = vpack.c.b16 %v424, %v423
  %v446 = vpack.c.b16 %v426, %v425
  %v447 = vpack.c.b16 %v428, %v427
  %v448 = vpack.c.b16 %v430, %v429
  %v449 = vpack.c.b16 %v432, %v431
  %v450 = vpack.c.b16 %v434, %v433
  %467 = vmatpush.bf16.msra.mxu0 %v442
  %468 = vmatpush.bf16.msra.mxu0 %v441
  %469 = vmatpush.bf16.msra.mxu0 %v440
  %470 = vmatpush.bf16.msra.mxu0 %v439
  %471 = vmatpush.bf16.msra.mxu0 %v438
  %472 = vmatpush.bf16.msra.mxu0 %v437
  %473 = vmatpush.bf16.msra.mxu0 %v436
  %474 = vmatpush.bf16.msra.mxu0 %v435
  %475 = vmatmul.bf16.gmra.mxu0 %v333
  %v476 = vpop.f32.mrf.mxu0
  %v477 = vadd.f32 %v369, %v476
  %v478 = vpop.f32.mrf.mxu0
  %479 = vdwg.mxu0
  %480 = vmatpush.bf16.msra.mxu0 %v450
  %481 = vmatpush.bf16.msra.mxu0 %v449
  %482 = vmatpush.bf16.msra.mxu0 %v448
  %483 = vmatpush.bf16.msra.mxu0 %v447
  %484 = vmatpush.bf16.msra.mxu0 %v446
  %485 = vmatpush.bf16.msra.mxu0 %v445
  %486 = vmatpush.bf16.msra.mxu0 %v444
  %487 = vmatpush.bf16.msra.mxu0 %v443
  %488 = vmatmul.bf16.gmra.mxu0 %v334
  %v489 = vpop.f32.mrf.mxu0
  %v490 = vadd.f32 %v477, %v489
  %v491 = vpop.f32.mrf.mxu0
  %492 = vdwg.mxu0
  %v493 = vtanh.pop %v490
  %494 = vst [vmem:[%s7] sm:$0xff] %v493
  // Predicated region
  $region30: #{mu_fc_forward.1} parent=0 // pred_check
    _
  $region31: #{mu_fc_forward.1} parent=0 // pred_check_branch
    %496 = sbr.rel (0) target = $region33
  $region32: #{mu_fc_forward.1} parent=0 // pred_region
    _
  $region33: #{mu_fc_forward.1} parent=0 // pred_fallthru
    _
  // Predicated region
  $region34: #{mu_fc_forward.1} parent=0 // pred_check
    _
  $region35: #{mu_fc_forward.1} parent=0 // pred_check_branch
    %498 = sbr.rel (0) target = $region37
  $region36: #{mu_fc_forward.1} parent=0 // pred_region
    _
  $region37: #{mu_fc_forward.1} parent=0 // pred_fallthru
    _

</llo_original>
